<compile_context>
chip_gen: v5e
topology: v5e:2x2
jax: 0.10.0
libtpu: 0.0.40
codegen_flags: <defaults>
</compile_context>

<pallas_src>
import functools

import jax
import jax.numpy as jnp
from jax.experimental import pallas as pl
from jax.experimental.pallas import tpu as pltpu

EPS = 1e-5
EXPANSION = 4
LANE = 128                       # channel dims padded to a multiple of this


# ---------------------------------------------------------------------------
# small helpers
# ---------------------------------------------------------------------------
def _round_up(n, m):
    return ((n + m - 1) // m) * m


def _vmem_limit_bytes():
    cap = 64 * 1024 * 1024
    try:
        info = pltpu.get_tpu_info()
        cap = int(getattr(info, "vmem_capacity_bytes", cap))
    except Exception:
        pass
    # 128-MiB parts (v5e/v6e) -> 96 MiB scoped; 64-MiB parts (v7x) -> 48 MiB.
    return max(32 * 1024 * 1024, min(96 * 1024 * 1024, (cap * 3) // 4))


VMEM_LIMIT = _vmem_limit_bytes()
MAX_ROW_TILE = 1024 if VMEM_LIMIT >= 80 * 1024 * 1024 else 512
_ROW_TILE_CANDIDATES = (1024, 512, 384, 256, 192, 128, 96, 64, 32, 16, 8)


def _row_plan(m):
    """Return (padded_rows, row_tile).  Prefers a tile that divides m exactly
    so no row padding / in-kernel masking is needed; falls back to 8-row pad."""
    mp = _round_up(m, 8)
    for t in _ROW_TILE_CANDIDATES:
        if t <= MAX_ROW_TILE and mp % t == 0:
            return mp, t
    return mp, 8


def _pad_rows(a, rows):
    if a.shape[0] == rows:
        return a
    return jnp.pad(a, ((0, rows - a.shape[0]),) + ((0, 0),) * (a.ndim - 1))


def _cparams(*sem):
    return pltpu.CompilerParams(dimension_semantics=sem,
                                vmem_limit_bytes=VMEM_LIMIT)


# ---------------------------------------------------------------------------
# Kernel 1: 1x1 conv as a single-K-pass tiled matmul
#           + optional fused input BN/ReLU + per-M-tile BN partial statistics
# ---------------------------------------------------------------------------
def _matmul_stats_kernel(x_ref, w_ref, si_ref, hi_ref, y_ref, sum_ref, ssq_ref,
                         *, fuse_bn, relu_in, tm, m_true, mask_rows):
    x = x_ref[...]
    if fuse_bn:
        xf = x.astype(jnp.float32) * si_ref[...] + hi_ref[...]
        if relu_in:
            xf = jnp.maximum(xf, 0.0)
        x = xf.astype(jnp.bfloat16)
    acc = jnp.dot(x, w_ref[...], preferred_element_type=jnp.float32)
    if mask_rows:  # keep padded rows exactly zero so batch stats stay exact
        rows = (jax.lax.broadcasted_iota(jnp.int32, acc.shape, 0)
                + pl.program_id(0) * tm)
        acc = jnp.where(rows < m_true, acc, 0.0)
    y_ref[...] = acc.astype(y_ref.dtype)
    # per-channel sum / sum-of-squares via ones-vector matmuls (MXU, f32 acc)
    ones = jnp.ones((1, acc.shape[0]), jnp.float32)
    sum_ref[...] = jnp.dot(ones, acc, preferred_element_type=jnp.float32)
    ssq_ref[...] = jnp.dot(ones, acc * acc, preferred_element_type=jnp.float32)


def matmul_stats(x2d, w2d, *, m_true, scale=None, shift=None, relu_in=False):
    """x2d: [M, K] bf16, w2d: [K, C] bf16 (K, C multiples of 128, K <= ~2048).
    Optionally applies y = relu(x*scale + shift) per-channel to the input
    before the matmul (fused BN of the previous stage).
    Returns y [Mp, C] bf16, per-tile sums [n_m, C] f32, sums-of-squares."""
    m, k = x2d.shape
    k2, c = w2d.shape
    assert k == k2 and c % LANE == 0 and k % LANE == 0 and k <= 4096
    mp, tm = _row_plan(m)
    if mp != m:
        x2d = _pad_rows(x2d, mp)
    fuse_bn = scale is not None
    if scale is None:
        scale = jnp.ones((1, k), jnp.float32)
        shift = jnp.zeros((1, k), jnp.float32)
    scale = scale.reshape(1, k).astype(jnp.float32)
    shift = shift.reshape(1, k).astype(jnp.float32)
    n_m = mp // tm

    kernel = functools.partial(_matmul_stats_kernel, fuse_bn=fuse_bn,
                               relu_in=relu_in, tm=tm, m_true=m_true,
                               mask_rows=(mp != m_true))
    y, sm, sq = pl.pallas_call(
        kernel,
        out_shape=(jax.ShapeDtypeStruct((mp, c), jnp.bfloat16),
                   jax.ShapeDtypeStruct((n_m, c), jnp.float32),
                   jax.ShapeDtypeStruct((n_m, c), jnp.float32)),
        grid=(n_m,),
        in_specs=[pl.BlockSpec((tm, k), lambda i: (i, 0)),
                  pl.BlockSpec((k, c), lambda i: (0, 0)),
                  pl.BlockSpec((1, k), lambda i: (0, 0)),
                  pl.BlockSpec((1, k), lambda i: (0, 0))],
        out_specs=(pl.BlockSpec((tm, c), lambda i: (i, 0)),
                   pl.BlockSpec((1, c), lambda i: (i, 0)),
                   pl.BlockSpec((1, c), lambda i: (i, 0))),
        compiler_params=_cparams("parallel"),
    )(x2d, w2d, scale, shift)
    return y, sm, sq


# ---------------------------------------------------------------------------
# Kernel 2a: stride-1 3x3 conv (pad=1) with FUSED input BN+ReLU.
#   The kernel builds the BN'd + zero-padded image in a bf16 VMEM scratch
#   (padding applied AFTER BN/ReLU, matching conv2's zero-padding semantics),
#   then accumulates 9 shifted matmuls into an f32 VMEM scratch.
# ---------------------------------------------------------------------------
def _conv3x3_s1_kernel(x_ref, w_ref, s_ref, b_ref, y_ref, sum_ref, ssq_ref,
                       xpad_ref, acc_ref, *, h, w):
    cin = x_ref.shape[-1]
    xb = (x_ref[0].astype(jnp.float32) * s_ref[...].reshape(1, 1, cin)
          + b_ref[...].reshape(1, 1, cin))
    xb = jnp.maximum(xb, 0.0).astype(jnp.bfloat16)
    xpad_ref[...] = jnp.zeros(xpad_ref.shape, xpad_ref.dtype)
    xpad_ref[1:h + 1, 1:w + 1, :] = xb

    acc_ref[...] = jnp.zeros(acc_ref.shape, acc_ref.dtype)
    for ky in range(3):
        for kx in range(3):
            patch = xpad_ref[ky:ky + h, kx:kx + w, :]
            acc_ref[...] += jnp.dot(patch.reshape(h * w, cin), w_ref[ky, kx],
                                    preferred_element_type=jnp.float32)
    acc = acc_ref[...]
    y_ref[0] = acc.astype(y_ref.dtype)
    ones = jnp.ones((1, h * w), jnp.float32)
    sum_ref[...] = jnp.dot(ones, acc, preferred_element_type=jnp.float32)
    ssq_ref[...] = jnp.dot(ones, acc * acc, preferred_element_type=jnp.float32)


def conv3x3_s1_stats(x_img, w4d, scale, shift):
    """x_img: [N, H, W, Cin] bf16 RAW conv1 output (pre-BN); BN(scale/shift)
    + ReLU is applied inside the kernel.  Returns y [N, H*W, Cout] bf16 and
    per-image BN partial sums / sums-of-squares [N, Cout] f32."""
    n, h, w, cin = x_img.shape
    cout = w4d.shape[-1]
    scale = scale.reshape(1, cin).astype(jnp.float32)
    shift = shift.reshape(1, cin).astype(jnp.float32)
    kernel = functools.partial(_conv3x3_s1_kernel, h=h, w=w)
    y, sm, sq = pl.pallas_call(
        kernel,
        out_shape=(jax.ShapeDtypeStruct((n, h * w, cout), jnp.bfloat16),
                   jax.ShapeDtypeStruct((n, cout), jnp.float32),
                   jax.ShapeDtypeStruct((n, cout), jnp.float32)),
        grid=(n,),
        in_specs=[pl.BlockSpec((1, h, w, cin), lambda i: (i, 0, 0, 0)),
                  pl.BlockSpec((3, 3, cin, cout), lambda i: (0, 0, 0, 0)),
                  pl.BlockSpec((1, cin), lambda i: (0, 0)),
                  pl.BlockSpec((1, cin), lambda i: (0, 0))],
        out_specs=(pl.BlockSpec((1, h * w, cout), lambda i: (i, 0, 0)),
                   pl.BlockSpec((1, cout), lambda i: (i, 0)),
                   pl.BlockSpec((1, cout), lambda i: (i, 0))),
        scratch_shapes=[pltpu.VMEM((h + 2, w + 2, cin), jnp.bfloat16),
                        pltpu.VMEM((h * w, cout), jnp.float32)],
        compiler_params=_cparams("parallel"),
    )(x_img, w4d, scale, shift)
    return y, sm, sq, h, w


# ---------------------------------------------------------------------------
# Kernel 2b: stride-s (s>1) 3x3 conv via phase decomposition (glue builds the
#   padded phases from the already-BN'd activation), f32 VMEM accumulator.
# ---------------------------------------------------------------------------
def _conv3x3_phase_kernel(ph_ref, w_ref, y_ref, sum_ref, ssq_ref, acc_ref,
                          *, stride, ho, wo):
    cin = ph_ref.shape[-1]
    acc_ref[...] = jnp.zeros(acc_ref.shape, acc_ref.dtype)
    for ky in range(3):
        for kx in range(3):
            a, dy = ky % stride, ky // stride
            b, dx = kx % stride, kx // stride
            patch = ph_ref[a * stride + b, dy:dy + ho, dx:dx + wo, :]
            acc_ref[...] += jnp.dot(patch.reshape(ho * wo, cin), w_ref[ky, kx],
                                    preferred_element_type=jnp.float32)
    acc = acc_ref[...]
    y_ref[0] = acc.astype(y_ref.dtype)
    ones = jnp.ones((1, ho * wo), jnp.float32)
    sum_ref[...] = jnp.dot(ones, acc, preferred_element_type=jnp.float32)
    ssq_ref[...] = jnp.dot(ones, acc * acc, preferred_element_type=jnp.float32)


def conv3x3_phase_stats(x_nhwc, w4d, stride):
    """x_nhwc: [N, H, W, Cin] bf16 (already BN'd + ReLU'd), stride > 1."""
    n, h, w, cin = x_nhwc.shape
    cout = w4d.shape[-1]
    ho = (h - 1) // stride + 1
    wo = (w - 1) // stride + 1
    s = stride
    xp = jnp.pad(x_nhwc, ((0, 0), (1, 1), (1, 1), (0, 0)))
    # phase decomposition: stride-s taps become static slices of phases
    phs = [xp[:, a::s, b::s, :] for a in range(s) for b in range(s)]
    hm = max(p.shape[1] for p in phs)
    wm = max(p.shape[2] for p in phs)
    phs = [jnp.pad(p, ((0, 0), (0, hm - p.shape[1]),
                       (0, wm - p.shape[2]), (0, 0))) for p in phs]
    phases = jnp.stack(phs, axis=1).reshape(n * s * s, hm, wm, cin)

    kernel = functools.partial(_conv3x3_phase_kernel, stride=s, ho=ho, wo=wo)
    y, sm, sq = pl.pallas_call(
        kernel,
        out_shape=(jax.ShapeDtypeStruct((n, ho * wo, cout), jnp.bfloat16),
                   jax.ShapeDtypeStruct((n, cout), jnp.float32),
                   jax.ShapeDtypeStruct((n, cout), jnp.float32)),
        grid=(n,),
        in_specs=[pl.BlockSpec((s * s, hm, wm, cin), lambda i: (i, 0, 0, 0)),
                  pl.BlockSpec((3, 3, cin, cout), lambda i: (0, 0, 0, 0))],
        out_specs=(pl.BlockSpec((1, ho * wo, cout), lambda i: (i, 0, 0)),
                   pl.BlockSpec((1, cout), lambda i: (i, 0)),
                   pl.BlockSpec((1, cout), lambda i: (i, 0))),
        scratch_shapes=[pltpu.VMEM((ho * wo, cout), jnp.float32)],
        compiler_params=_cparams("parallel"),
    )(phases, w4d)
    return y, sm, sq, ho, wo


# ---------------------------------------------------------------------------
# Kernel 3: standalone BN apply (+ReLU)   (only used on the stride>1 path)
# Kernel 4: BN apply + BN'd residual + add + ReLU (stage-3 epilogue, bf16 out)
# ---------------------------------------------------------------------------
def _bn_act_kernel(y_ref, s_ref, b_ref, o_ref, *, relu):
    out = y_ref[...].astype(jnp.float32) * s_ref[...] + b_ref[...]
    if relu:
        out = jnp.maximum(out, 0.0)
    o_ref[...] = out.astype(o_ref.dtype)


def bn_act(y, scale, shift, *, relu, out_dtype):
    m, c = y.shape
    mp, tm = _row_plan(m)
    if mp != m:
        y = _pad_rows(y, mp)
    kernel = functools.partial(_bn_act_kernel, relu=relu)
    return pl.pallas_call(
        kernel,
        out_shape=jax.ShapeDtypeStruct((mp, c), out_dtype),
        grid=(mp // tm,),
        in_specs=[pl.BlockSpec((tm, c), lambda i: (i, 0)),
                  pl.BlockSpec((1, c), lambda i: (0, 0)),
                  pl.BlockSpec((1, c), lambda i: (0, 0))],
        out_specs=pl.BlockSpec((tm, c), lambda i: (i, 0)),
        compiler_params=_cparams("parallel"),
    )(y, scale, shift)


def _bn_add_relu_kernel(y_ref, r_ref, s_ref, b_ref, rs_ref, rb_ref, o_ref):
    out = y_ref[...].astype(jnp.float32) * s_ref[...] + b_ref[...]
    out = out + r_ref[...].astype(jnp.float32) * rs_ref[...] + rb_ref[...]
    o_ref[...] = jnp.maximum(out, 0.0).astype(o_ref.dtype)


def bn_add_relu(y, res, scale, shift, r_scale, r_shift):
    mp, c = y.shape
    _, tm = _row_plan(mp)
    return pl.pallas_call(
        _bn_add_relu_kernel,
        out_shape=jax.ShapeDtypeStruct((mp, c), jnp.bfloat16),
        grid=(mp // tm,),
        in_specs=[pl.BlockSpec((tm, c), lambda i: (i, 0)),
                  pl.BlockSpec((tm, c), lambda i: (i, 0)),
                  pl.BlockSpec((1, c), lambda i: (0, 0)),
                  pl.BlockSpec((1, c), lambda i: (0, 0)),
                  pl.BlockSpec((1, c), lambda i: (0, 0)),
                  pl.BlockSpec((1, c), lambda i: (0, 0))],
        out_specs=pl.BlockSpec((tm, c), lambda i: (i, 0)),
        compiler_params=_cparams("parallel"),
    )(y, res, scale, shift, r_scale, r_shift)


# ---------------------------------------------------------------------------
# tiny plain-JAX glue: partial stats -> BN scale/shift
# (f32 sums; biased batch variance, same as nn.BatchNorm2d training.  NOTE:
#  E[x^2]-mean^2 can cancel for |mean| >> std; fine for conv activations.)
# ---------------------------------------------------------------------------
def _bn_scale_shift(sm, sq, gamma, beta, count):
    s = jnp.sum(sm, axis=0)
    ss = jnp.sum(sq, axis=0)
    mean = s / jnp.float32(count)
    var = jnp.maximum(ss / jnp.float32(count) - mean * mean, 0.0)
    inv = jax.lax.rsqrt(var + EPS)
    scale = (gamma * inv).astype(jnp.float32)
    shift = (beta - mean * scale).astype(jnp.float32)
    return scale.reshape(1, -1), shift.reshape(1, -1)


# ---------------------------------------------------------------------------
# Bottleneck forward (Pallas path)
# ---------------------------------------------------------------------------
def bottleneck_forward(x_nchw, P, stride=1):
    x = jnp.transpose(x_nchw, (0, 2, 3, 1))              # NHWC
    n, h, w, cin = x.shape
    cin_p, c1_p = P["w1_p"].shape
    c3_p = P["w3_p"].shape[1]
    out_planes = P["w3_t"].shape[0]

    # channel-pad once, cast to bf16 for the MXU
    x_bf = jnp.pad(x, ((0, 0), (0, 0), (0, 0), (0, cin_p - cin))
                   ).astype(jnp.bfloat16)

    # -------- stage 1: 1x1 conv (raw) + batch stats --------
    m1 = n * h * w
    y1, sm1, sq1 = matmul_stats(x_bf.reshape(m1, cin_p), P["w1_p"], m_true=m1)
    s1, h1 = _bn_scale_shift(sm1, sq1, P["g1_p"], P["b1_p"], m1)

    # -------- stage 2: 3x3 conv (pad=1) + batch stats --------
    if stride == 1:
        # BN1 + ReLU fused into the conv kernel (no HBM round trip for out1)
        y1_img = y1[:m1].reshape(n, h, w, c1_p)
        y2, sm2, sq2, ho, wo = conv3x3_s1_stats(y1_img, P["w2_p"], s1, h1)
    else:
        out1 = bn_act(y1, s1, h1, relu=True, out_dtype=jnp.bfloat16)
        out1 = out1[:m1].reshape(n, h, w, c1_p)
        y2, sm2, sq2, ho, wo = conv3x3_phase_stats(out1, P["w2_p"], stride)
    m2 = n * ho * wo
    s2, h2 = _bn_scale_shift(sm2, sq2, P["g2_p"], P["b2_p"], m2)

    # -------- stage 3: 1x1 conv with fused BN2+ReLU on its input --------
    y3, sm3, sq3 = matmul_stats(y2.reshape(m2, c1_p), P["w3_p"], m_true=m2,
                                scale=s2, shift=h2, relu_in=True)
    s3, h3 = _bn_scale_shift(sm3, sq3, P["g3_p"], P["b3_p"], m2)

    # -------- shortcut --------
    if "ws_p" in P:                                      # projection: conv+BN
        xs = x_bf[:, ::stride, ::stride, :].reshape(m2, cin_p)
        ysc, sms, sqs = matmul_stats(xs, P["ws_p"], m_true=m2)
        ssc, hsc = _bn_scale_shift(sms, sqs, P["gs_p"], P["bs_p"], m2)
    else:                                                # identity: reuse x_bf
        ysc = x_bf.reshape(m1, cin_p)
        ssc = jnp.ones((1, c3_p), jnp.float32)
        hsc = jnp.zeros((1, c3_p), jnp.float32)
    ysc = _pad_rows(ysc, y3.shape[0])

    # -------- fused epilogue: BN(main) + BN(shortcut) + add + ReLU --------
    out3 = bn_add_relu(y3, ysc, s3, h3, ssc, hsc)        # bf16

    out = out3[:m2].reshape(n, ho, wo, c3_p)[:, :, :, :out_planes]
    return jnp.transpose(out, (0, 3, 1, 2)).astype(jnp.float32)   # NCHW


# ---------------------------------------------------------------------------
# Deterministic parameter init (PyTorch OIHW layouts kept for the reference,
# lane-padded bf16 matrix forms for the Pallas kernels)
# ---------------------------------------------------------------------------
def init_params(key, in_planes, planes, stride, dtype=jnp.float32):
    exp = EXPANSION
    ks = jax.random.split(key, 12)
    w1_t = 0.1 * jax.random.normal(ks[0], (planes, in_planes, 1, 1), dtype)
    w2_t = 0.1 * jax.random.normal(ks[1], (planes, planes, 3, 3), dtype)
    w3_t = 0.1 * jax.random.normal(ks[2], (exp * planes, planes, 1, 1), dtype)

    def bn(kg, kb, c):
        return (1.0 + 0.1 * jax.random.normal(kg, (c,), dtype),
                0.1 * jax.random.normal(kb, (c,), dtype))

    g1, b1 = bn(ks[3], ks[4], planes)
    g2, b2 = bn(ks[5], ks[6], planes)
    g3, b3 = bn(ks[7], ks[8], exp * planes)

    cin_p = _round_up(in_planes, LANE)
    c1_p = _round_up(planes, LANE)
    c3_p = _round_up(exp * planes, LANE)

    def pad2(a, r, c):
        return jnp.pad(a, ((0, r - a.shape[0]), (0, c - a.shape[1])))

    def padv(v, c):
        return jnp.pad(v, (0, c - v.shape[0]))

    w2_hwio = jnp.transpose(w2_t, (2, 3, 1, 0))           # (3,3,Cin,Cout)
    P = {
        # padded bf16 matrix forms consumed by the Pallas kernels
        "w1_p": pad2(w1_t[:, :, 0, 0].T, cin_p, c1_p).astype(jnp.bfloat16),
        "w2_p": jnp.pad(w2_hwio, ((0, 0), (0, 0),
                                  (0, c1_p - planes),
                                  (0, c1_p - planes))).astype(jnp.bfloat16),
        "w3_p": pad2(w3_t[:, :, 0, 0].T, c1_p, c3_p).astype(jnp.bfloat16),
        "g1_p": padv(g1, c1_p), "b1_p": padv(b1, c1_p),
        "g2_p": padv(g2, c1_p), "b2_p": padv(b2, c1_p),
        "g3_p": padv(g3, c3_p), "b3_p": padv(b3, c3_p),
        # PyTorch-layout copies for the pure-JAX reference
        "w1_t": w1_t, "w2_t": w2_t, "w3_t": w3_t,
        "g1": g1, "b1": b1, "g2": g2, "b2": b2, "g3": g3, "b3": b3,
    }
    if stride != 1 or in_planes != exp * planes:
        ws_t = 0.1 * jax.random.normal(ks[9], (exp * planes, in_planes, 1, 1),
                                       dtype)
        gs, bs = bn(ks[10], ks[11], exp * planes)
        P.update({
            "ws_p": pad2(ws_t[:, :, 0, 0].T, cin_p, c3_p).astype(jnp.bfloat16),
            "gs_p": padv(gs, c3_p), "bs_p": padv(bs, c3_p),
            "ws_t": ws_t, "gs": gs, "bs": bs,
        })
    return P


# ---------------------------------------------------------------------------
# Pure-JAX reference (f32, lax.conv on the PyTorch-layout weights)
# ---------------------------------------------------------------------------
def _conv_nchw(x, w_oihw, stride=1, padding=0):
    return jax.lax.conv_general_dilated(
        x, w_oihw, window_strides=(stride, stride),
        padding=[(padding, padding), (padding, padding)],
        dimension_numbers=("NCHW", "OIHW", "NCHW"))


def _bn_train(x, gamma, beta):
    mean = jnp.mean(x, axis=(0, 2, 3), keepdims=True)
    var = jnp.mean(jnp.square(x - mean), axis=(0, 2, 3), keepdims=True)
    xhat = (x - mean) * jax.lax.rsqrt(var + EPS)
    return xhat * gamma.reshape(1, -1, 1, 1) + beta.reshape(1, -1, 1, 1)


def reference_forward(x, P, stride=1):
    out = jax.nn.relu(_bn_train(_conv_nchw(x, P["w1_t"]), P["g1"], P["b1"]))
    out = jax.nn.relu(_bn_train(_conv_nchw(out, P["w2_t"], stride=stride,
                                           padding=1), P["g2"], P["b2"]))
    out = _bn_train(_conv_nchw(out, P["w3_t"]), P["g3"], P["b3"])
    if "ws_t" in P:
        sc = _bn_train(_conv_nchw(x, P["ws_t"], stride=stride),
                       P["gs"], P["bs"])
    else:
        sc = x
    return jax.nn.relu(out + sc)


# ---------------------------------------------------------------------------
if __name__ == "__main__":
    key = jax.random.PRNGKey(0)
    kx, kp1, kp2, kp3 = jax.random.split(key, 4)

    configs = [
        # (in_planes, planes, stride, H, W, param_key)
        (4, 4, 1, 16, 16, kp1),     # projection shortcut (channel expansion)
        (4, 4, 2, 16, 16, kp2),     # projection shortcut, stride 2
        (16, 4, 1, 24, 24, kp3),    # identity shortcut
    ]
    for in_planes, planes, stride, H, W, kp in configs:
        x = jax.random.normal(kx, (2, in_planes, H, W), jnp.float32)  # NCHW
        P = init_params(kp, in_planes, planes, stride)

        out = jax.block_until_ready(bottleneck_forward(x, P, stride=stride))
        ref = reference_forward(x, P, stride=stride)

        ho = (H - 1) // stride + 1
        wo = (W - 1) // stride + 1
        assert out.shape == (2, EXPANSION * planes, ho, wo), out.shape
        max_err = float(jnp.max(jnp.abs(out - ref)))
        # bf16 MXU operands / bf16 epilogue vs f32 reference -> loose tolerance
        assert jnp.allclose(out, ref, atol=5e-2, rtol=5e-2), (
            f"mismatch (in_planes={in_planes}, stride={stride}, H={H}): "
            f"max abs err {max_err}")

    print("KERNEL_OK")
</pallas_src>

<mosaic_0001>
module attributes {stable_mosaic.version = 11 : i64} {
  func.func @_matmul_stats_kernel(%arg0: i32, %arg1: memref<512x128xbf16, #tpu.memory_space<vmem>>, %arg2: memref<128x128xbf16, #tpu.memory_space<vmem>>, %arg3: memref<1x128xf32, #tpu.memory_space<vmem>>, %arg4: memref<1x128xf32, #tpu.memory_space<vmem>>, %arg5: memref<512x128xbf16, #tpu.memory_space<vmem>>, %arg6: memref<1x128xf32, #tpu.memory_space<vmem>>, %arg7: memref<1x128xf32, #tpu.memory_space<vmem>>) attributes {dimension_semantics = [#tpu.dimension_semantics<parallel>], iteration_bounds = array<i64: 1>, scalar_prefetch = 0 : i64, scratch_operands = 0 : i64, tpu.core_type = #tpu.core_type<tc>, window_params = [{transform_indices = @transform_0, window_bounds = array<i64: 512, 128>}, {pipeline_mode = #tpu.pipeline_mode<synchronous>, transform_indices = @transform_1, window_bounds = array<i64: 128, 128>}, {pipeline_mode = #tpu.pipeline_mode<synchronous>, transform_indices = @transform_2, window_bounds = array<i64: 1, 128>}, {pipeline_mode = #tpu.pipeline_mode<synchronous>, transform_indices = @transform_3, window_bounds = array<i64: 1, 128>}, {transform_indices = @transform_4, window_bounds = array<i64: 512, 128>}, {transform_indices = @transform_5, window_bounds = array<i64: 1, 128>}, {transform_indices = @transform_6, window_bounds = array<i64: 1, 128>}]} {
    %c0 = arith.constant 0 : index
    %c0_0 = arith.constant 0 : index
    %0 = vector.load %arg1[%c0, %c0_0] : memref<512x128xbf16, #tpu.memory_space<vmem>>, vector<512x128xbf16>
    %c0_1 = arith.constant 0 : index
    %c0_2 = arith.constant 0 : index
    %1 = vector.load %arg2[%c0_1, %c0_2] : memref<128x128xbf16, #tpu.memory_space<vmem>>, vector<128x128xbf16>
    %cst = arith.constant dense<0.000000e+00> : vector<512x128xf32>
    %2 = tpu.matmul %0, %1, %cst {dimension_numbers = #tpu.dot_dimension_numbers<[1], [0], [0], [1], [0, 0, 1, 1], [], []>} : vector<512x128xbf16>, vector<128x128xbf16>, vector<512x128xf32> -> vector<512x128xf32>
    %3 = arith.truncf %2 : vector<512x128xf32> to vector<512x128xbf16>
    %c0_3 = arith.constant 0 : index
    %c0_4 = arith.constant 0 : index
    %4 = vector.load %arg5[%c0_3, %c0_4] : memref<512x128xbf16, #tpu.memory_space<vmem>>, vector<512x128xbf16>
    tpu.vector_store %arg5[%c0_3, %c0_4], %3 {strides = array<i32>} : memref<512x128xbf16, #tpu.memory_space<vmem>>, vector<512x128xbf16>,
    %cst_5 = arith.constant 1.000000e+00 : f32
    %5 = vector.broadcast %cst_5 : f32 to vector<1x512xf32>
    %cst_6 = arith.constant dense<0.000000e+00> : vector<1x128xf32>
    %6 = tpu.matmul %5, %2, %cst_6 {dimension_numbers = #tpu.dot_dimension_numbers<[1], [0], [0], [1], [0, 0, 1, 1], [], []>} : vector<1x512xf32>, vector<512x128xf32>, vector<1x128xf32> -> vector<1x128xf32>
    %c0_7 = arith.constant 0 : index
    %c0_8 = arith.constant 0 : index
    %7 = vector.load %arg6[%c0_7, %c0_8] : memref<1x128xf32, #tpu.memory_space<vmem>>, vector<1x128xf32>
    tpu.vector_store %arg6[%c0_7, %c0_8], %6 {strides = array<i32>} : memref<1x128xf32, #tpu.memory_space<vmem>>, vector<1x128xf32>,
    %8 = arith.mulf %2, %2 : vector<512x128xf32>
    %cst_9 = arith.constant dense<0.000000e+00> : vector<1x128xf32>
    %9 = tpu.matmul %5, %8, %cst_9 {dimension_numbers = #tpu.dot_dimension_numbers<[1], [0], [0], [1], [0, 0, 1, 1], [], []>} : vector<1x512xf32>, vector<512x128xf32>, vector<1x128xf32> -> vector<1x128xf32>
    %c0_10 = arith.constant 0 : index
    %c0_11 = arith.constant 0 : index
    %10 = vector.load %arg7[%c0_10, %c0_11] : memref<1x128xf32, #tpu.memory_space<vmem>>, vector<1x128xf32>
    tpu.vector_store %arg7[%c0_10, %c0_11], %9 {strides = array<i32>} : memref<1x128xf32, #tpu.memory_space<vmem>>, vector<1x128xf32>,
    return
  }
  func.func @transform_0(%arg0: i32) -> (i32, i32) {
    %c0_i32 = arith.constant 0 : i32
    %c0_i32_0 = arith.constant 0 : i32
    return %arg0, %c0_i32 : i32, i32
  }
  func.func @transform_1(%arg0: i32) -> (i32, i32) {
    %c0_i32 = arith.constant 0 : i32
    %c0_i32_0 = arith.constant 0 : i32
    %c0_i32_1 = arith.constant 0 : i32
    return %c0_i32, %c0_i32_0 : i32, i32
  }
  func.func @transform_2(%arg0: i32) -> (i32, i32) {
    %c0_i32 = arith.constant 0 : i32
    %c0_i32_0 = arith.constant 0 : i32
    %c0_i32_1 = arith.constant 0 : i32
    return %c0_i32, %c0_i32_0 : i32, i32
  }
  func.func @transform_3(%arg0: i32) -> (i32, i32) {
    %c0_i32 = arith.constant 0 : i32
    %c0_i32_0 = arith.constant 0 : i32
    %c0_i32_1 = arith.constant 0 : i32
    return %c0_i32, %c0_i32_0 : i32, i32
  }
  func.func @transform_4(%arg0: i32) -> (i32, i32) {
    %c0_i32 = arith.constant 0 : i32
    %c0_i32_0 = arith.constant 0 : i32
    return %arg0, %c0_i32 : i32, i32
  }
  func.func @transform_5(%arg0: i32) -> (i32, i32) {
    %c0_i32 = arith.constant 0 : i32
    %c0_i32_0 = arith.constant 0 : i32
    return %arg0, %c0_i32 : i32, i32
  }
  func.func @transform_6(%arg0: i32) -> (i32, i32) {
    %c0_i32 = arith.constant 0 : i32
    %c0_i32_0 = arith.constant 0 : i32
    return %arg0, %c0_i32 : i32, i32
  }
}

</mosaic_0001>

<llo_original>
// kernel: tpu_custom_call.1
$region0: #{tpu_custom_call.1}
  #allocation0 [shape = 'u32[]', space=smem, size = 0x4, offset = 0x4, fixed_abs, tag = 'smem constant byte address 0x4 - core index']
  #allocation1 [shape = 'u32[72,128]{1,0:T(1,128)}', space=vmem, size = 0x9000, scoped, tag = 'internal scratch']
  %s0 = inlined_call_operand.hbm [shape: bf16[512,128], index: 0, kind: input, shape index: {}]
  %s1 = inlined_call_operand.hbm [shape: bf16[128,128], index: 1, kind: input, shape index: {}]
  %s2 = inlined_call_operand.vmem [shape: f32[1,128], index: 2, kind: input, shape index: {}]
  %s3 = inlined_call_operand.vmem [shape: f32[1,128], index: 3, kind: input, shape index: {}]
  %s4 = inlined_call_operand.hbm [shape: bf16[512,128], index: 4, kind: output, shape index: {0}]
  %s5 = inlined_call_operand.hbm [shape: f32[1,128], index: 5, kind: output, shape index: {1}]
  %s6 = inlined_call_operand.hbm [shape: f32[1,128], index: 6, kind: output, shape index: {2}]
  %7 = xla_tuple %s4, %s5, %s6
  %s8 = sld [smem:[#allocation0]]
  $region50: #{tpu_custom_call.1} parent=0
    _
  %s10 = ssub.s32 1, %s8
  %s11 = scalar_select 0, %s10, %s8
  $region1: #{tpu_custom_call.1} parent=0
    #allocation2 [shape = 'u8[131072]{0}', space=vmem, size = 0x20000, scoped, tag = 'input window, operand 0, single buffered']
    #allocation3 [shape = 's32[1]{0}', space=sflag, size = 0x4, scoped, tag = 'scoped memory for tpu_custom_call.1']
    #allocation4 [shape = 's32[1]{0}', space=sflag, size = 0x4, scoped, tag = 'scoped memory for tpu_custom_call.1']
    #allocation5 [shape = 'u8[32768]{0}', space=vmem, size = 0x8000, scoped, tag = 'input window, operand 1, single buffered']
    #allocation6 [shape = 's32[1]{0}', space=sflag, size = 0x4, scoped, tag = 'scoped memory for tpu_custom_call.1']
    #allocation7 [shape = 'u8[131072]{0}', space=vmem, size = 0x20000, scoped, tag = 'output window, operand 0, single buffered']
    #allocation8 [shape = 'u8[512]{0}', space=vmem, size = 0x400, scoped, tag = 'output window, operand 1, single buffered']
    #allocation9 [shape = 's32[1]{0}', space=sflag, size = 0x4, scoped, tag = 'scoped memory for tpu_custom_call.1']
    #allocation10 [shape = 'u8[512]{0}', space=vmem, size = 0x400, scoped, tag = 'output window, operand 2, single buffered']
    %12 = vsyncpa [#allocation3], 0
    %13 = vsyncpa [#allocation6], 0
    %14 = vsyncpa [#allocation4], 0
    %15 = vsyncpa [#allocation9], 0
    // Predicated region
    $region2: #{tpu_custom_call.1} parent=1 // pred_check
      _
    $region3: #{tpu_custom_call.1} parent=1 // pred_check_branch
      %17 = sbr.rel (0) target = $region5
    $region4: #{tpu_custom_call.1} parent=1 // pred_region
      %19 = vsyncadd [#allocation3], 0
      %s20 = sshll.u32 %s0, 4
      %s21 = int_to_ptr.hbm [resolvable:$true] %s20
      %s22 = sshll.u32 [#allocation2], 4
      %s23 = int_to_ptr.vmem [resolvable:$true] %s22
      %28 = dma.hbm_to_vmem [thread:$0]  %s21, 4096, %s23, [#allocation3], 64, 64, 4
    $region5: #{tpu_custom_call.1} parent=1 // pred_fallthru
      _
    // Predicated region
    $region6: #{tpu_custom_call.1} parent=1 // pred_check
      _
    $region7: #{tpu_custom_call.1} parent=1 // pred_check_branch
      %30 = sbr.rel (0) target = $region9
    $region8: #{tpu_custom_call.1} parent=1 // pred_region
      %32 = vsyncadd [#allocation6], 0
      %s33 = sshll.u32 %s1, 4
      %s34 = int_to_ptr.hbm [resolvable:$true] %s33
      %s35 = sshll.u32 [#allocation5], 4
      %s36 = int_to_ptr.vmem [resolvable:$true] %s35
      %41 = dma.hbm_to_vmem [thread:$0]  %s34, 1024, %s36, [#allocation6], 64, 64, 4
    $region9: #{tpu_custom_call.1} parent=1 // pred_fallthru
      _
    // Predicated region
    $region10: #{tpu_custom_call.1} parent=1 // pred_check
      _
    $region11: #{tpu_custom_call.1} parent=1 // pred_check_branch
      %43 = sbr.rel (0) target = $region13
    $region12: #{tpu_custom_call.1} parent=1 // pred_region
      _
    $region13: #{tpu_custom_call.1} parent=1 // pred_fallthru
      _
    // Predicated region
    $region14: #{tpu_custom_call.1} parent=1 // pred_check
      _
    $region15: #{tpu_custom_call.1} parent=1 // pred_check_branch
      %45 = sbr.rel (0) target = $region17
    $region16: #{tpu_custom_call.1} parent=1 // pred_region
      _
    $region17: #{tpu_custom_call.1} parent=1 // pred_fallthru
      _
    // Predicated region
    $region18: #{tpu_custom_call.1} parent=1 // pred_check
      _
    $region19: #{tpu_custom_call.1} parent=1 // pred_check_branch
      %47 = sbr.rel (0) target = $region21
    $region20: #{tpu_custom_call.1} parent=1 // pred_region
      %49 = dma.done [#allocation3], 4096
    $region21: #{tpu_custom_call.1} parent=1 // pred_fallthru
      _
    // Predicated region
    $region22: #{tpu_custom_call.1} parent=1 // pred_check
      _
    $region23: #{tpu_custom_call.1} parent=1 // pred_check_branch
      %51 = sbr.rel (0) target = $region25
    $region24: #{tpu_custom_call.1} parent=1 // pred_region
      %53 = dma.done [#allocation6], 1024
    $region25: #{tpu_custom_call.1} parent=1 // pred_fallthru
      _
    %v54 = vld [vmem:[#allocation2] sm:$0xf]
    %v55 = vld [vmem:[#allocation2 + $0x4] sm:$0xf]
    %v56 = vld [vmem:[#allocation2 + $0x8] sm:$0xf]
    %v57 = vld [vmem:[#allocation2 + $0xc] sm:$0xf]
    %v58 = vld [vmem:[#allocation2 + $0x10] sm:$0xf]
    %v59 = vld [vmem:[#allocation2 + $0x14] sm:$0xf]
    %v60 = vld [vmem:[#allocation2 + $0x18] sm:$0xf]
    %v61 = vld [vmem:[#allocation2 + $0x1c] sm:$0xf]
    %v62 = vld [vmem:[#allocation2 + $0x20] sm:$0xf]
    %v63 = vld [vmem:[#allocation2 + $0x24] sm:$0xf]
    %v64 = vld [vmem:[#allocation2 + $0x28] sm:$0xf]
    %v65 = vld [vmem:[#allocation2 + $0x2c] sm:$0xf]
    %v66 = vld [vmem:[#allocation2 + $0x30] sm:$0xf]
    %v67 = vld [vmem:[#allocation2 + $0x34] sm:$0xf]
    %v68 = vld [vmem:[#allocation2 + $0x38] sm:$0xf]
    %v69 = vld [vmem:[#allocation2 + $0x3c] sm:$0xf]
    %v70 = vld [vmem:[#allocation2 + $0x40] sm:$0xf]
    %v71 = vld [vmem:[#allocation2 + $0x44] sm:$0xf]
    %v72 = vld [vmem:[#allocation2 + $0x48] sm:$0xf]
    %v73 = vld [vmem:[#allocation2 + $0x4c] sm:$0xf]
    %v74 = vld [vmem:[#allocation2 + $0x50] sm:$0xf]
    %v75 = vld [vmem:[#allocation2 + $0x54] sm:$0xf]
    %v76 = vld [vmem:[#allocation2 + $0x58] sm:$0xf]
    %v77 = vld [vmem:[#allocation2 + $0x5c] sm:$0xf]
    %v78 = vld [vmem:[#allocation2 + $0x60] sm:$0xf]
    %v79 = vld [vmem:[#allocation2 + $0x64] sm:$0xf]
    %v80 = vld [vmem:[#allocation2 + $0x68] sm:$0xf]
    %v81 = vld [vmem:[#allocation2 + $0x6c] sm:$0xf]
    %v82 = vld [vmem:[#allocation2 + $0x70] sm:$0xf]
    %v83 = vld [vmem:[#allocation2 + $0x74] sm:$0xf]
    %v84 = vld [vmem:[#allocation2 + $0x78] sm:$0xf]
    %v85 = vld [vmem:[#allocation2 + $0x7c] sm:$0xf]
    %v86 = vld [vmem:[#allocation2 + $0x80] sm:$0xf]
    %v87 = vld [vmem:[#allocation2 + $0x84] sm:$0xf]
    %v88 = vld [vmem:[#allocation2 + $0x88] sm:$0xf]
    %v89 = vld [vmem:[#allocation2 + $0x8c] sm:$0xf]
    %v90 = vld [vmem:[#allocation2 + $0x90] sm:$0xf]
    %v91 = vld [vmem:[#allocation2 + $0x94] sm:$0xf]
    %v92 = vld [vmem:[#allocation2 + $0x98] sm:$0xf]
    %v93 = vld [vmem:[#allocation2 + $0x9c] sm:$0xf]
    %v94 = vld [vmem:[#allocation2 + $0xa0] sm:$0xf]
    %v95 = vld [vmem:[#allocation2 + $0xa4] sm:$0xf]
    %v96 = vld [vmem:[#allocation2 + $0xa8] sm:$0xf]
    %v97 = vld [vmem:[#allocation2 + $0xac] sm:$0xf]
    %v98 = vld [vmem:[#allocation2 + $0xb0] sm:$0xf]
    %v99 = vld [vmem:[#allocation2 + $0xb4] sm:$0xf]
    %v100 = vld [vmem:[#allocation2 + $0xb8] sm:$0xf]
    %v101 = vld [vmem:[#allocation2 + $0xbc] sm:$0xf]
    %v102 = vld [vmem:[#allocation2 + $0xc0] sm:$0xf]
    %v103 = vld [vmem:[#allocation2 + $0xc4] sm:$0xf]
    %v104 = vld [vmem:[#allocation2 + $0xc8] sm:$0xf]
    %v105 = vld [vmem:[#allocation2 + $0xcc] sm:$0xf]
    %v106 = vld [vmem:[#allocation2 + $0xd0] sm:$0xf]
    %v107 = vld [vmem:[#allocation2 + $0xd4] sm:$0xf]
    %v108 = vld [vmem:[#allocation2 + $0xd8] sm:$0xf]
    %v109 = vld [vmem:[#allocation2 + $0xdc] sm:$0xf]
    %v110 = vld [vmem:[#allocation2 + $0xe0] sm:$0xf]
    %v111 = vld [vmem:[#allocation2 + $0xe4] sm:$0xf]
    %v112 = vld [vmem:[#allocation2 + $0xe8] sm:$0xf]
    %v113 = vld [vmem:[#allocation2 + $0xec] sm:$0xf]
    %v114 = vld [vmem:[#allocation2 + $0xf0] sm:$0xf]
    %v115 = vld [vmem:[#allocation2 + $0xf4] sm:$0xf]
    %v116 = vld [vmem:[#allocation2 + $0xf8] sm:$0xf]
    %v117 = vld [vmem:[#allocation2 + $0xfc] sm:$0xf]
    %v118 = vld [vmem:[#allocation5] sm:$0xf]
    %v119 = vld [vmem:[#allocation5 + $0x4] sm:$0xf]
    %v120 = vld [vmem:[#allocation5 + $0x8] sm:$0xf]
    %v121 = vld [vmem:[#allocation5 + $0xc] sm:$0xf]
    %v122 = vld [vmem:[#allocation5 + $0x10] sm:$0xf]
    %v123 = vld [vmem:[#allocation5 + $0x14] sm:$0xf]
    %v124 = vld [vmem:[#allocation5 + $0x18] sm:$0xf]
    %v125 = vld [vmem:[#allocation5 + $0x1c] sm:$0xf]
    %v126 = vld [vmem:[#allocation5 + $0x20] sm:$0xf]
    %v127 = vld [vmem:[#allocation5 + $0x24] sm:$0xf]
    %v128 = vld [vmem:[#allocation5 + $0x28] sm:$0xf]
    %v129 = vld [vmem:[#allocation5 + $0x2c] sm:$0xf]
    %v130 = vld [vmem:[#allocation5 + $0x30] sm:$0xf]
    %v131 = vld [vmem:[#allocation5 + $0x34] sm:$0xf]
    %v132 = vld [vmem:[#allocation5 + $0x38] sm:$0xf]
    %v133 = vld [vmem:[#allocation5 + $0x3c] sm:$0xf]
    %v198 = vunpack.c.l.b16 %v54
    %v199 = vunpack.c.l.b16 %v55
    %v200 = vunpack.c.l.b16 %v56
    %v201 = vunpack.c.l.b16 %v57
    %v202 = vunpack.c.l.b16 %v58
    %v203 = vunpack.c.l.b16 %v59
    %v204 = vunpack.c.l.b16 %v60
    %v205 = vunpack.c.l.b16 %v61
    %v206 = vunpack.c.l.b16 %v62
    %v207 = vunpack.c.l.b16 %v63
    %v208 = vunpack.c.l.b16 %v64
    %v209 = vunpack.c.l.b16 %v65
    %v210 = vunpack.c.l.b16 %v66
    %v211 = vunpack.c.l.b16 %v67
    %v212 = vunpack.c.l.b16 %v68
    %v213 = vunpack.c.l.b16 %v69
    %v214 = vunpack.c.l.b16 %v70
    %v215 = vunpack.c.l.b16 %v71
    %v216 = vunpack.c.l.b16 %v72
    %v217 = vunpack.c.l.b16 %v73
    %v218 = vunpack.c.l.b16 %v74
    %v219 = vunpack.c.l.b16 %v75
    %v220 = vunpack.c.l.b16 %v76
    %v221 = vunpack.c.l.b16 %v77
    %v222 = vunpack.c.l.b16 %v78
    %v223 = vunpack.c.l.b16 %v79
    %v224 = vunpack.c.l.b16 %v80
    %v225 = vunpack.c.l.b16 %v81
    %v226 = vunpack.c.l.b16 %v82
    %v227 = vunpack.c.l.b16 %v83
    %v228 = vunpack.c.l.b16 %v84
    %v229 = vunpack.c.l.b16 %v85
    %v230 = vunpack.c.l.b16 %v86
    %v231 = vunpack.c.l.b16 %v87
    %v232 = vunpack.c.l.b16 %v88
    %v233 = vunpack.c.l.b16 %v89
    %v234 = vunpack.c.l.b16 %v90
    %v235 = vunpack.c.l.b16 %v91
    %v236 = vunpack.c.l.b16 %v92
    %v237 = vunpack.c.l.b16 %v93
    %v238 = vunpack.c.l.b16 %v94
    %v239 = vunpack.c.l.b16 %v95
    %v240 = vunpack.c.l.b16 %v96
    %v241 = vunpack.c.l.b16 %v97
    %v242 = vunpack.c.l.b16 %v98
    %v243 = vunpack.c.l.b16 %v99
    %v244 = vunpack.c.l.b16 %v100
    %v245 = vunpack.c.l.b16 %v101
    %v246 = vunpack.c.l.b16 %v102
    %v247 = vunpack.c.l.b16 %v103
    %v248 = vunpack.c.l.b16 %v104
    %v249 = vunpack.c.l.b16 %v105
    %v250 = vunpack.c.l.b16 %v106
    %v251 = vunpack.c.l.b16 %v107
    %v252 = vunpack.c.l.b16 %v108
    %v253 = vunpack.c.l.b16 %v109
    %v254 = vunpack.c.l.b16 %v110
    %v255 = vunpack.c.l.b16 %v111
    %v256 = vunpack.c.l.b16 %v112
    %v257 = vunpack.c.l.b16 %v113
    %v258 = vunpack.c.l.b16 %v114
    %v259 = vunpack.c.l.b16 %v115
    %v260 = vunpack.c.l.b16 %v116
    %v261 = vunpack.c.l.b16 %v117
    %v262 = vpack.c.b16 %v199, %v198
    %v263 = vpack.c.b16 %v201, %v200
    %v264 = vpack.c.b16 %v203, %v202
    %v265 = vpack.c.b16 %v205, %v204
    %v266 = vpack.c.b16 %v207, %v206
    %v267 = vpack.c.b16 %v209, %v208
    %v268 = vpack.c.b16 %v211, %v210
    %v269 = vpack.c.b16 %v213, %v212
    %v270 = vpack.c.b16 %v215, %v214
    %v271 = vpack.c.b16 %v217, %v216
    %v272 = vpack.c.b16 %v219, %v218
    %v273 = vpack.c.b16 %v221, %v220
    %v274 = vpack.c.b16 %v223, %v222
    %v275 = vpack.c.b16 %v225, %v224
    %v276 = vpack.c.b16 %v227, %v226
    %v277 = vpack.c.b16 %v229, %v228
    %v278 = vpack.c.b16 %v231, %v230
    %v279 = vpack.c.b16 %v233, %v232
    %v280 = vpack.c.b16 %v235, %v234
    %v281 = vpack.c.b16 %v237, %v236
    %v282 = vpack.c.b16 %v239, %v238
    %v283 = vpack.c.b16 %v241, %v240
    %v284 = vpack.c.b16 %v243, %v242
    %v285 = vpack.c.b16 %v245, %v244
    %v286 = vpack.c.b16 %v247, %v246
    %v287 = vpack.c.b16 %v249, %v248
    %v288 = vpack.c.b16 %v251, %v250
    %v289 = vpack.c.b16 %v253, %v252
    %v290 = vpack.c.b16 %v255, %v254
    %v291 = vpack.c.b16 %v257, %v256
    %v292 = vpack.c.b16 %v259, %v258
    %v293 = vpack.c.b16 %v261, %v260
    %v342 = vunpack.c.l.b16 %v118
    %v343 = vunpack.c.l.b16 %v119
    %v344 = vunpack.c.l.b16 %v120
    %v345 = vunpack.c.l.b16 %v121
    %v346 = vunpack.c.l.b16 %v122
    %v347 = vunpack.c.l.b16 %v123
    %v348 = vunpack.c.l.b16 %v124
    %v349 = vunpack.c.l.b16 %v125
    %v350 = vunpack.c.l.b16 %v126
    %v351 = vunpack.c.l.b16 %v127
    %v352 = vunpack.c.l.b16 %v128
    %v353 = vunpack.c.l.b16 %v129
    %v354 = vunpack.c.l.b16 %v130
    %v355 = vunpack.c.l.b16 %v131
    %v356 = vunpack.c.l.b16 %v132
    %v357 = vunpack.c.l.b16 %v133
    %v358 = vpack.c.b16 %v343, %v342
    %v359 = vpack.c.b16 %v345, %v344
    %v360 = vpack.c.b16 %v347, %v346
    %v361 = vpack.c.b16 %v349, %v348
    %v362 = vpack.c.b16 %v351, %v350
    %v363 = vpack.c.b16 %v353, %v352
    %v364 = vpack.c.b16 %v355, %v354
    %v365 = vpack.c.b16 %v357, %v356
    %374 = vmatpush.bf16.msra.mxu0 %v365
    %375 = vmatpush.bf16.msra.mxu0 %v364
    %376 = vmatpush.bf16.msra.mxu0 %v363
    %377 = vmatpush.bf16.msra.mxu0 %v362
    %378 = vmatpush.bf16.msra.mxu0 %v361
    %379 = vmatpush.bf16.msra.mxu0 %v360
    %380 = vmatpush.bf16.msra.mxu0 %v359
    %381 = vmatpush.bf16.msra.mxu0 %v358
    %382 = vmatmul.bf16.gmra.mxu0 %v262
    %v383 = vpop.f32.mrf.mxu0
    %v384 = vadd.f32 0.0, %v383
    %v385 = vpop.f32.mrf.mxu0
    %v386 = vadd.f32 0.0, %v385
    %387 = vmatmul.bf16.gmra.mxu0 %v263
    %v388 = vpop.f32.mrf.mxu0
    %v389 = vadd.f32 0.0, %v388
    %v390 = vpop.f32.mrf.mxu0
    %v391 = vadd.f32 0.0, %v390
    %392 = vmatmul.bf16.gmra.mxu0 %v264
    %v393 = vpop.f32.mrf.mxu0
    %v394 = vadd.f32 0.0, %v393
    %v395 = vpop.f32.mrf.mxu0
    %v396 = vadd.f32 0.0, %v395
    %397 = vmatmul.bf16.gmra.mxu0 %v265
    %v398 = vpop.f32.mrf.mxu0
    %v399 = vadd.f32 0.0, %v398
    %v400 = vpop.f32.mrf.mxu0
    %v401 = vadd.f32 0.0, %v400
    %402 = vmatmul.bf16.gmra.mxu0 %v266
    %v403 = vpop.f32.mrf.mxu0
    %v404 = vadd.f32 0.0, %v403
    %v405 = vpop.f32.mrf.mxu0
    %v406 = vadd.f32 0.0, %v405
    %407 = vmatmul.bf16.gmra.mxu0 %v267
    %v408 = vpop.f32.mrf.mxu0
    %v409 = vadd.f32 0.0, %v408
    %v410 = vpop.f32.mrf.mxu0
    %v411 = vadd.f32 0.0, %v410
    %412 = vmatmul.bf16.gmra.mxu0 %v268
    %v413 = vpop.f32.mrf.mxu0
    %v414 = vadd.f32 0.0, %v413
    %v415 = vpop.f32.mrf.mxu0
    %v416 = vadd.f32 0.0, %v415
    %417 = vmatmul.bf16.gmra.mxu0 %v269
    %v418 = vpop.f32.mrf.mxu0
    %v419 = vadd.f32 0.0, %v418
    %v420 = vpop.f32.mrf.mxu0
    %v421 = vadd.f32 0.0, %v420
    %422 = vmatmul.bf16.gmra.mxu0 %v270
    %v423 = vpop.f32.mrf.mxu0
    %v424 = vadd.f32 0.0, %v423
    %v425 = vpop.f32.mrf.mxu0
    %v426 = vadd.f32 0.0, %v425
    %427 = vmatmul.bf16.gmra.mxu0 %v271
    %v428 = vpop.f32.mrf.mxu0
    %v429 = vadd.f32 0.0, %v428
    %v430 = vpop.f32.mrf.mxu0
    %v431 = vadd.f32 0.0, %v430
    %432 = vmatmul.bf16.gmra.mxu0 %v272
    %v433 = vpop.f32.mrf.mxu0
    %v434 = vadd.f32 0.0, %v433
    %v435 = vpop.f32.mrf.mxu0
    %v436 = vadd.f32 0.0, %v435
    %437 = vmatmul.bf16.gmra.mxu0 %v273
    %v438 = vpop.f32.mrf.mxu0
    %v439 = vadd.f32 0.0, %v438
    %v440 = vpop.f32.mrf.mxu0
    %v441 = vadd.f32 0.0, %v440
    %442 = vmatmul.bf16.gmra.mxu0 %v274
    %v443 = vpop.f32.mrf.mxu0
    %v444 = vadd.f32 0.0, %v443
    %v445 = vpop.f32.mrf.mxu0
    %v446 = vadd.f32 0.0, %v445
    %447 = vmatmul.bf16.gmra.mxu0 %v275
    %v448 = vpop.f32.mrf.mxu0
    %v449 = vadd.f32 0.0, %v448
    %v450 = vpop.f32.mrf.mxu0
    %v451 = vadd.f32 0.0, %v450
    %452 = vmatmul.bf16.gmra.mxu0 %v276
    %v453 = vpop.f32.mrf.mxu0
    %v454 = vadd.f32 0.0, %v453
    %v455 = vpop.f32.mrf.mxu0
    %v456 = vadd.f32 0.0, %v455
    %457 = vmatmul.bf16.gmra.mxu0 %v277
    %v458 = vpop.f32.mrf.mxu0
    %v459 = vadd.f32 0.0, %v458
    %v460 = vpop.f32.mrf.mxu0
    %v461 = vadd.f32 0.0, %v460
    %462 = vmatmul.bf16.gmra.mxu0 %v278
    %v463 = vpop.f32.mrf.mxu0
    %v464 = vadd.f32 0.0, %v463
    %v465 = vpop.f32.mrf.mxu0
    %v466 = vadd.f32 0.0, %v465
    %467 = vmatmul.bf16.gmra.mxu0 %v279
    %v468 = vpop.f32.mrf.mxu0
    %v469 = vadd.f32 0.0, %v468
    %v470 = vpop.f32.mrf.mxu0
    %v471 = vadd.f32 0.0, %v470
    %472 = vmatmul.bf16.gmra.mxu0 %v280
    %v473 = vpop.f32.mrf.mxu0
    %v474 = vadd.f32 0.0, %v473
    %v475 = vpop.f32.mrf.mxu0
    %v476 = vadd.f32 0.0, %v475
    %477 = vmatmul.bf16.gmra.mxu0 %v281
    %v478 = vpop.f32.mrf.mxu0
    %v479 = vadd.f32 0.0, %v478
    %v480 = vpop.f32.mrf.mxu0
    %v481 = vadd.f32 0.0, %v480
    %482 = vmatmul.bf16.gmra.mxu0 %v282
    %v483 = vpop.f32.mrf.mxu0
    %v484 = vadd.f32 0.0, %v483
    %v485 = vpop.f32.mrf.mxu0
    %v486 = vadd.f32 0.0, %v485
    %487 = vmatmul.bf16.gmra.mxu0 %v283
    %v488 = vpop.f32.mrf.mxu0
    %v489 = vadd.f32 0.0, %v488
    %v490 = vpop.f32.mrf.mxu0
    %v491 = vadd.f32 0.0, %v490
    %492 = vmatmul.bf16.gmra.mxu0 %v284
    %v493 = vpop.f32.mrf.mxu0
    %v494 = vadd.f32 0.0, %v493
    %v495 = vpop.f32.mrf.mxu0
    %v496 = vadd.f32 0.0, %v495
    %497 = vmatmul.bf16.gmra.mxu0 %v285
    %v498 = vpop.f32.mrf.mxu0
    %v499 = vadd.f32 0.0, %v498
    %v500 = vpop.f32.mrf.mxu0
    %v501 = vadd.f32 0.0, %v500
    %502 = vmatmul.bf16.gmra.mxu0 %v286
    %v503 = vpop.f32.mrf.mxu0
    %v504 = vadd.f32 0.0, %v503
    %v505 = vpop.f32.mrf.mxu0
    %v506 = vadd.f32 0.0, %v505
    %507 = vmatmul.bf16.gmra.mxu0 %v287
    %v508 = vpop.f32.mrf.mxu0
    %v509 = vadd.f32 0.0, %v508
    %v510 = vpop.f32.mrf.mxu0
    %v511 = vadd.f32 0.0, %v510
    %512 = vmatmul.bf16.gmra.mxu0 %v288
    %v513 = vpop.f32.mrf.mxu0
    %v514 = vadd.f32 0.0, %v513
    %v515 = vpop.f32.mrf.mxu0
    %v516 = vadd.f32 0.0, %v515
    %517 = vmatmul.bf16.gmra.mxu0 %v289
    %v518 = vpop.f32.mrf.mxu0
    %v519 = vadd.f32 0.0, %v518
    %v520 = vpop.f32.mrf.mxu0
    %v521 = vadd.f32 0.0, %v520
    %522 = vmatmul.bf16.gmra.mxu0 %v290
    %v523 = vpop.f32.mrf.mxu0
    %v524 = vadd.f32 0.0, %v523
    %v525 = vpop.f32.mrf.mxu0
    %v526 = vadd.f32 0.0, %v525
    %527 = vmatmul.bf16.gmra.mxu0 %v291
    %v528 = vpop.f32.mrf.mxu0
    %v529 = vadd.f32 0.0, %v528
    %v530 = vpop.f32.mrf.mxu0
    %v531 = vadd.f32 0.0, %v530
    %532 = vmatmul.bf16.gmra.mxu0 %v292
    %v533 = vpop.f32.mrf.mxu0
    %v534 = vadd.f32 0.0, %v533
    %v535 = vpop.f32.mrf.mxu0
    %v536 = vadd.f32 0.0, %v535
    %537 = vmatmul.bf16.gmra.mxu0 %v293
    %v538 = vpop.f32.mrf.mxu0
    %v539 = vadd.f32 0.0, %v538
    %v540 = vpop.f32.mrf.mxu0
    %v541 = vadd.f32 0.0, %v540
    %542 = vdwg.mxu0
    %v543 = vpack.c.bf16 %v384, %v384
    %v544 = vpack.c.bf16 %v386, %v386
    %v545 = vpack.c.bf16 %v389, %v389
    %v546 = vpack.c.bf16 %v391, %v391
    %v547 = vpack.c.bf16 %v394, %v394
    %v548 = vpack.c.bf16 %v396, %v396
    %v549 = vpack.c.bf16 %v399, %v399
    %v550 = vpack.c.bf16 %v401, %v401
    %v551 = vpack.c.bf16 %v404, %v404
    %v552 = vpack.c.bf16 %v406, %v406
    %v553 = vpack.c.bf16 %v409, %v409
    %v554 = vpack.c.bf16 %v411, %v411
    %v555 = vpack.c.bf16 %v414, %v414
    %v556 = vpack.c.bf16 %v416, %v416
    %v557 = vpack.c.bf16 %v419, %v419
    %v558 = vpack.c.bf16 %v421, %v421
    %v559 = vpack.c.bf16 %v424, %v424
    %v560 = vpack.c.bf16 %v426, %v426
    %v561 = vpack.c.bf16 %v429, %v429
    %v562 = vpack.c.bf16 %v431, %v431
    %v563 = vpack.c.bf16 %v434, %v434
    %v564 = vpack.c.bf16 %v436, %v436
    %v565 = vpack.c.bf16 %v439, %v439
    %v566 = vpack.c.bf16 %v441, %v441
    %v567 = vpack.c.bf16 %v444, %v444
    %v568 = vpack.c.bf16 %v446, %v446
    %v569 = vpack.c.bf16 %v449, %v449
    %v570 = vpack.c.bf16 %v451, %v451
    %v571 = vpack.c.bf16 %v454, %v454
    %v572 = vpack.c.bf16 %v456, %v456
    %v573 = vpack.c.bf16 %v459, %v459
    %v574 = vpack.c.bf16 %v461, %v461
    %v575 = vpack.c.bf16 %v464, %v464
    %v576 = vpack.c.bf16 %v466, %v466
    %v577 = vpack.c.bf16 %v469, %v469
    %v578 = vpack.c.bf16 %v471, %v471
    %v579 = vpack.c.bf16 %v474, %v474
    %v580 = vpack.c.bf16 %v476, %v476
    %v581 = vpack.c.bf16 %v479, %v479
    %v582 = vpack.c.bf16 %v481, %v481
    %v583 = vpack.c.bf16 %v484, %v484
    %v584 = vpack.c.bf16 %v486, %v486
    %v585 = vpack.c.bf16 %v489, %v489
    %v586 = vpack.c.bf16 %v491, %v491
    %v587 = vpack.c.bf16 %v494, %v494
    %v588 = vpack.c.bf16 %v496, %v496
    %v589 = vpack.c.bf16 %v499, %v499
    %v590 = vpack.c.bf16 %v501, %v501
    %v591 = vpack.c.bf16 %v504, %v504
    %v592 = vpack.c.bf16 %v506, %v506
    %v593 = vpack.c.bf16 %v509, %v509
    %v594 = vpack.c.bf16 %v511, %v511
    %v595 = vpack.c.bf16 %v514, %v514
    %v596 = vpack.c.bf16 %v516, %v516
    %v597 = vpack.c.bf16 %v519, %v519
    %v598 = vpack.c.bf16 %v521, %v521
    %v599 = vpack.c.bf16 %v524, %v524
    %v600 = vpack.c.bf16 %v526, %v526
    %v601 = vpack.c.bf16 %v529, %v529
    %v602 = vpack.c.bf16 %v531, %v531
    %v603 = vpack.c.bf16 %v534, %v534
    %v604 = vpack.c.bf16 %v536, %v536
    %v605 = vpack.c.bf16 %v539, %v539
    %v606 = vpack.c.bf16 %v541, %v541
    %607 = vst [vmem:[#allocation7] sm:$0xf] %v543
    %608 = vst [vmem:[#allocation7 + $0x4] sm:$0xf] %v544
    %609 = vst [vmem:[#allocation7 + $0x8] sm:$0xf] %v545
    %610 = vst [vmem:[#allocation7 + $0xc] sm:$0xf] %v546
    %611 = vst [vmem:[#allocation7 + $0x10] sm:$0xf] %v547
    %612 = vst [vmem:[#allocation7 + $0x14] sm:$0xf] %v548
    %613 = vst [vmem:[#allocation7 + $0x18] sm:$0xf] %v549
    %614 = vst [vmem:[#allocation7 + $0x1c] sm:$0xf] %v550
    %615 = vst [vmem:[#allocation7 + $0x20] sm:$0xf] %v551
    %616 = vst [vmem:[#allocation7 + $0x24] sm:$0xf] %v552
    %617 = vst [vmem:[#allocation7 + $0x28] sm:$0xf] %v553
    %618 = vst [vmem:[#allocation7 + $0x2c] sm:$0xf] %v554
    %619 = vst [vmem:[#allocation7 + $0x30] sm:$0xf] %v555
    %620 = vst [vmem:[#allocation7 + $0x34] sm:$0xf] %v556
    %621 = vst [vmem:[#allocation7 + $0x38] sm:$0xf] %v557
    %622 = vst [vmem:[#allocation7 + $0x3c] sm:$0xf] %v558
    %623 = vst [vmem:[#allocation7 + $0x40] sm:$0xf] %v559
    %624 = vst [vmem:[#allocation7 + $0x44] sm:$0xf] %v560
    %625 = vst [vmem:[#allocation7 + $0x48] sm:$0xf] %v561
    %626 = vst [vmem:[#allocation7 + $0x4c] sm:$0xf] %v562
    %627 = vst [vmem:[#allocation7 + $0x50] sm:$0xf] %v563
    %628 = vst [vmem:[#allocation7 + $0x54] sm:$0xf] %v564
    %629 = vst [vmem:[#allocation7 + $0x58] sm:$0xf] %v565
    %630 = vst [vmem:[#allocation7 + $0x5c] sm:$0xf] %v566
    %631 = vst [vmem:[#allocation7 + $0x60] sm:$0xf] %v567
    %632 = vst [vmem:[#allocation7 + $0x64] sm:$0xf] %v568
    %633 = vst [vmem:[#allocation7 + $0x68] sm:$0xf] %v569
    %634 = vst [vmem:[#allocation7 + $0x6c] sm:$0xf] %v570
    %635 = vst [vmem:[#allocation7 + $0x70] sm:$0xf] %v571
    %636 = vst [vmem:[#allocation7 + $0x74] sm:$0xf] %v572
    %637 = vst [vmem:[#allocation7 + $0x78] sm:$0xf] %v573
    %638 = vst [vmem:[#allocation7 + $0x7c] sm:$0xf] %v574
    %639 = vst [vmem:[#allocation7 + $0x80] sm:$0xf] %v575
    %640 = vst [vmem:[#allocation7 + $0x84] sm:$0xf] %v576
    %641 = vst [vmem:[#allocation7 + $0x88] sm:$0xf] %v577
    %642 = vst [vmem:[#allocation7 + $0x8c] sm:$0xf] %v578
    %643 = vst [vmem:[#allocation7 + $0x90] sm:$0xf] %v579
    %644 = vst [vmem:[#allocation7 + $0x94] sm:$0xf] %v580
    %645 = vst [vmem:[#allocation7 + $0x98] sm:$0xf] %v581
    %646 = vst [vmem:[#allocation7 + $0x9c] sm:$0xf] %v582
    %647 = vst [vmem:[#allocation7 + $0xa0] sm:$0xf] %v583
    %648 = vst [vmem:[#allocation7 + $0xa4] sm:$0xf] %v584
    %649 = vst [vmem:[#allocation7 + $0xa8] sm:$0xf] %v585
    %650 = vst [vmem:[#allocation7 + $0xac] sm:$0xf] %v586
    %651 = vst [vmem:[#allocation7 + $0xb0] sm:$0xf] %v587
    %652 = vst [vmem:[#allocation7 + $0xb4] sm:$0xf] %v588
    %653 = vst [vmem:[#allocation7 + $0xb8] sm:$0xf] %v589
    %654 = vst [vmem:[#allocation7 + $0xbc] sm:$0xf] %v590
    %655 = vst [vmem:[#allocation7 + $0xc0] sm:$0xf] %v591
    %656 = vst [vmem:[#allocation7 + $0xc4] sm:$0xf] %v592
    %657 = vst [vmem:[#allocation7 + $0xc8] sm:$0xf] %v593
    %658 = vst [vmem:[#allocation7 + $0xcc] sm:$0xf] %v594
    %659 = vst [vmem:[#allocation7 + $0xd0] sm:$0xf] %v595
    %660 = vst [vmem:[#allocation7 + $0xd4] sm:$0xf] %v596
    %661 = vst [vmem:[#allocation7 + $0xd8] sm:$0xf] %v597
    %662 = vst [vmem:[#allocation7 + $0xdc] sm:$0xf] %v598
    %663 = vst [vmem:[#allocation7 + $0xe0] sm:$0xf] %v599
    %664 = vst [vmem:[#allocation7 + $0xe4] sm:$0xf] %v600
    %665 = vst [vmem:[#allocation7 + $0xe8] sm:$0xf] %v601
    %666 = vst [vmem:[#allocation7 + $0xec] sm:$0xf] %v602
    %667 = vst [vmem:[#allocation7 + $0xf0] sm:$0xf] %v603
    %668 = vst [vmem:[#allocation7 + $0xf4] sm:$0xf] %v604
    %669 = vst [vmem:[#allocation7 + $0xf8] sm:$0xf] %v605
    %670 = vst [vmem:[#allocation7 + $0xfc] sm:$0xf] %v606
    %671 = vmatpush.msra.mxu0 %v421
    %672 = vmatpush.msra.mxu0 %v419
    %673 = vmatpush.msra.mxu0 %v416
    %674 = vmatpush.msra.mxu0 %v414
    %675 = vmatpush.msra.mxu0 %v411
    %676 = vmatpush.msra.mxu0 %v409
    %677 = vmatpush.msra.mxu0 %v406
    %678 = vmatpush.msra.mxu0 %v404
    %679 = vmatpush.msra.mxu0 %v401
    %680 = vmatpush.msra.mxu0 %v399
    %681 = vmatpush.msra.mxu0 %v396
    %682 = vmatpush.msra.mxu0 %v394
    %683 = vmatpush.msra.mxu0 %v391
    %684 = vmatpush.msra.mxu0 %v389
    %685 = vmatpush.msra.mxu0 %v386
    %686 = vmatpush.msra.mxu0 %v384
    %687 = vmatmul.f32.gmra.mxu0 1.0
    %v688 = vpop.f32.mrf.mxu0
    %v689 = vadd.f32 0.0, %v688
    %690 = vdwg.mxu0
    %691 = vmatpush.msra.mxu0 %v461
    %692 = vmatpush.msra.mxu0 %v459
    %693 = vmatpush.msra.mxu0 %v456
    %694 = vmatpush.msra.mxu0 %v454
    %695 = vmatpush.msra.mxu0 %v451
    %696 = vmatpush.msra.mxu0 %v449
    %697 = vmatpush.msra.mxu0 %v446
    %698 = vmatpush.msra.mxu0 %v444
    %699 = vmatpush.msra.mxu0 %v441
    %700 = vmatpush.msra.mxu0 %v439
    %701 = vmatpush.msra.mxu0 %v436
    %702 = vmatpush.msra.mxu0 %v434
    %703 = vmatpush.msra.mxu0 %v431
    %704 = vmatpush.msra.mxu0 %v429
    %705 = vmatpush.msra.mxu0 %v426
    %706 = vmatpush.msra.mxu0 %v424
    %707 = vmatmul.f32.gmra.mxu0 1.0
    %v708 = vpop.f32.mrf.mxu0
    %v709 = vadd.f32 %v689, %v708
    %710 = vdwg.mxu0
    %711 = vmatpush.msra.mxu0 %v501
    %712 = vmatpush.msra.mxu0 %v499
    %713 = vmatpush.msra.mxu0 %v496
    %714 = vmatpush.msra.mxu0 %v494
    %715 = vmatpush.msra.mxu0 %v491
    %716 = vmatpush.msra.mxu0 %v489
    %717 = vmatpush.msra.mxu0 %v486
    %718 = vmatpush.msra.mxu0 %v484
    %719 = vmatpush.msra.mxu0 %v481
    %720 = vmatpush.msra.mxu0 %v479
    %721 = vmatpush.msra.mxu0 %v476
    %722 = vmatpush.msra.mxu0 %v474
    %723 = vmatpush.msra.mxu0 %v471
    %724 = vmatpush.msra.mxu0 %v469
    %725 = vmatpush.msra.mxu0 %v466
    %726 = vmatpush.msra.mxu0 %v464
    %727 = vmatmul.f32.gmra.mxu0 1.0
    %v728 = vpop.f32.mrf.mxu0
    %v729 = vadd.f32 %v709, %v728
    %730 = vdwg.mxu0
    %731 = vmatpush.msra.mxu0 %v541
    %732 = vmatpush.msra.mxu0 %v539
    %733 = vmatpush.msra.mxu0 %v536
    %734 = vmatpush.msra.mxu0 %v534
    %735 = vmatpush.msra.mxu0 %v531
    %736 = vmatpush.msra.mxu0 %v529
    %737 = vmatpush.msra.mxu0 %v526
    %738 = vmatpush.msra.mxu0 %v524
    %739 = vmatpush.msra.mxu0 %v521
    %740 = vmatpush.msra.mxu0 %v519
    %741 = vmatpush.msra.mxu0 %v516
    %742 = vmatpush.msra.mxu0 %v514
    %743 = vmatpush.msra.mxu0 %v511
    %744 = vmatpush.msra.mxu0 %v509
    %745 = vmatpush.msra.mxu0 %v506
    %746 = vmatpush.msra.mxu0 %v504
    %747 = vmatmul.f32.gmra.mxu0 1.0
    %v748 = vpop.f32.mrf.mxu0
    %v749 = vadd.f32 %v729, %v748
    %750 = vdwg.mxu0
    %751 = vst [vmem:[#allocation8] sm:$0x1] %v749
    %v752 = vmul.f32 %v384, %v384
    %v753 = vmul.f32 %v386, %v386
    %v754 = vmul.f32 %v389, %v389
    %v755 = vmul.f32 %v391, %v391
    %v756 = vmul.f32 %v394, %v394
    %v757 = vmul.f32 %v396, %v396
    %v758 = vmul.f32 %v399, %v399
    %v759 = vmul.f32 %v401, %v401
    %v760 = vmul.f32 %v404, %v404
    %v761 = vmul.f32 %v406, %v406
    %v762 = vmul.f32 %v409, %v409
    %v763 = vmul.f32 %v411, %v411
    %v764 = vmul.f32 %v414, %v414
    %v765 = vmul.f32 %v416, %v416
    %v766 = vmul.f32 %v419, %v419
    %v767 = vmul.f32 %v421, %v421
    %v768 = vmul.f32 %v424, %v424
    %v769 = vmul.f32 %v426, %v426
    %v770 = vmul.f32 %v429, %v429
    %v771 = vmul.f32 %v431, %v431
    %v772 = vmul.f32 %v434, %v434
    %v773 = vmul.f32 %v436, %v436
    %v774 = vmul.f32 %v439, %v439
    %v775 = vmul.f32 %v441, %v441
    %v776 = vmul.f32 %v444, %v444
    %v777 = vmul.f32 %v446, %v446
    %v778 = vmul.f32 %v449, %v449
    %v779 = vmul.f32 %v451, %v451
    %v780 = vmul.f32 %v454, %v454
    %v781 = vmul.f32 %v456, %v456
    %v782 = vmul.f32 %v459, %v459
    %v783 = vmul.f32 %v461, %v461
    %v784 = vmul.f32 %v464, %v464
    %v785 = vmul.f32 %v466, %v466
    %v786 = vmul.f32 %v469, %v469
    %v787 = vmul.f32 %v471, %v471
    %v788 = vmul.f32 %v474, %v474
    %v789 = vmul.f32 %v476, %v476
    %v790 = vmul.f32 %v479, %v479
    %v791 = vmul.f32 %v481, %v481
    %v792 = vmul.f32 %v484, %v484
    %v793 = vmul.f32 %v486, %v486
    %v794 = vmul.f32 %v489, %v489
    %v795 = vmul.f32 %v491, %v491
    %v796 = vmul.f32 %v494, %v494
    %v797 = vmul.f32 %v496, %v496
    %v798 = vmul.f32 %v499, %v499
    %v799 = vmul.f32 %v501, %v501
    %v800 = vmul.f32 %v504, %v504
    %v801 = vmul.f32 %v506, %v506
    %v802 = vmul.f32 %v509, %v509
    %v803 = vmul.f32 %v511, %v511
    %v804 = vmul.f32 %v514, %v514
    %v805 = vmul.f32 %v516, %v516
    %v806 = vmul.f32 %v519, %v519
    %v807 = vmul.f32 %v521, %v521
    %v808 = vmul.f32 %v524, %v524
    %v809 = vmul.f32 %v526, %v526
    %v810 = vmul.f32 %v529, %v529
    %v811 = vmul.f32 %v531, %v531
    %v812 = vmul.f32 %v534, %v534
    %v813 = vmul.f32 %v536, %v536
    %v814 = vmul.f32 %v539, %v539
    %v815 = vmul.f32 %v541, %v541
    %816 = vmatpush.msra.mxu0 %v767
    %817 = vmatpush.msra.mxu0 %v766
    %818 = vmatpush.msra.mxu0 %v765
    %819 = vmatpush.msra.mxu0 %v764
    %820 = vmatpush.msra.mxu0 %v763
    %821 = vmatpush.msra.mxu0 %v762
    %822 = vmatpush.msra.mxu0 %v761
    %823 = vmatpush.msra.mxu0 %v760
    %824 = vmatpush.msra.mxu0 %v759
    %825 = vmatpush.msra.mxu0 %v758
    %826 = vmatpush.msra.mxu0 %v757
    %827 = vmatpush.msra.mxu0 %v756
    %828 = vmatpush.msra.mxu0 %v755
    %829 = vmatpush.msra.mxu0 %v754
    %830 = vmatpush.msra.mxu0 %v753
    %831 = vmatpush.msra.mxu0 %v752
    %832 = vmatmul.f32.gmra.mxu0 1.0
    %v833 = vpop.f32.mrf.mxu0
    %v834 = vadd.f32 0.0, %v833
    %835 = vdwg.mxu0
    %836 = vmatpush.msra.mxu0 %v783
    %837 = vmatpush.msra.mxu0 %v782
    %838 = vmatpush.msra.mxu0 %v781
    %839 = vmatpush.msra.mxu0 %v780
    %840 = vmatpush.msra.mxu0 %v779
    %841 = vmatpush.msra.mxu0 %v778
    %842 = vmatpush.msra.mxu0 %v777
    %843 = vmatpush.msra.mxu0 %v776
    %844 = vmatpush.msra.mxu0 %v775
    %845 = vmatpush.msra.mxu0 %v774
    %846 = vmatpush.msra.mxu0 %v773
    %847 = vmatpush.msra.mxu0 %v772
    %848 = vmatpush.msra.mxu0 %v771
    %849 = vmatpush.msra.mxu0 %v770
    %850 = vmatpush.msra.mxu0 %v769
    %851 = vmatpush.msra.mxu0 %v768
    %852 = vmatmul.f32.gmra.mxu0 1.0
    %v853 = vpop.f32.mrf.mxu0
    %v854 = vadd.f32 %v834, %v853
    %855 = vdwg.mxu0
    %856 = vmatpush.msra.mxu0 %v799
    %857 = vmatpush.msra.mxu0 %v798
    %858 = vmatpush.msra.mxu0 %v797
    %859 = vmatpush.msra.mxu0 %v796
    %860 = vmatpush.msra.mxu0 %v795
    %861 = vmatpush.msra.mxu0 %v794
    %862 = vmatpush.msra.mxu0 %v793
    %863 = vmatpush.msra.mxu0 %v792
    %864 = vmatpush.msra.mxu0 %v791
    %865 = vmatpush.msra.mxu0 %v790
    %866 = vmatpush.msra.mxu0 %v789
    %867 = vmatpush.msra.mxu0 %v788
    %868 = vmatpush.msra.mxu0 %v787
    %869 = vmatpush.msra.mxu0 %v786
    %870 = vmatpush.msra.mxu0 %v785
    %871 = vmatpush.msra.mxu0 %v784
    %872 = vmatmul.f32.gmra.mxu0 1.0
    %v873 = vpop.f32.mrf.mxu0
    %v874 = vadd.f32 %v854, %v873
    %875 = vdwg.mxu0
    %876 = vmatpush.msra.mxu0 %v815
    %877 = vmatpush.msra.mxu0 %v814
    %878 = vmatpush.msra.mxu0 %v813
    %879 = vmatpush.msra.mxu0 %v812
    %880 = vmatpush.msra.mxu0 %v811
    %881 = vmatpush.msra.mxu0 %v810
    %882 = vmatpush.msra.mxu0 %v809
    %883 = vmatpush.msra.mxu0 %v808
    %884 = vmatpush.msra.mxu0 %v807
    %885 = vmatpush.msra.mxu0 %v806
    %886 = vmatpush.msra.mxu0 %v805
    %887 = vmatpush.msra.mxu0 %v804
    %888 = vmatpush.msra.mxu0 %v803
    %889 = vmatpush.msra.mxu0 %v802
    %890 = vmatpush.msra.mxu0 %v801
    %891 = vmatpush.msra.mxu0 %v800
    %892 = vmatmul.f32.gmra.mxu0 1.0
    %v893 = vpop.f32.mrf.mxu0
    %v894 = vadd.f32 %v874, %v893
    %895 = vdwg.mxu0
    %896 = vst [vmem:[#allocation10] sm:$0x1] %v894
    // Predicated region
    $region26: #{tpu_custom_call.1} parent=1 // pred_check
      _
    $region27: #{tpu_custom_call.1} parent=1 // pred_check_branch
      %898 = sbr.rel (0) target = $region29
    $region28: #{tpu_custom_call.1} parent=1 // pred_region
      %900 = vsyncadd [#allocation4], 0
      %s901 = sshll.u32 [#allocation7], 4
      %s902 = int_to_ptr.vmem [resolvable:$true] %s901
      %s903 = sshll.u32 %s4, 4
      %s904 = int_to_ptr.hbm [resolvable:$true] %s903
      %909 = dma.vmem_to_hbm [thread:$0]  %s902, 4096, %s904, [#allocation4], 64, 64, 4
    $region29: #{tpu_custom_call.1} parent=1 // pred_fallthru
      _
    // Predicated region
    $region30: #{tpu_custom_call.1} parent=1 // pred_check
      _
    $region31: #{tpu_custom_call.1} parent=1 // pred_check_branch
      %911 = sbr.rel (0) target = $region33
    $region32: #{tpu_custom_call.1} parent=1 // pred_region
      %913 = vsyncadd [#allocation9], 0
      %s915 = sshll.u32 [#allocation8], 4
      %s916 = int_to_ptr.vmem [resolvable:$true] %s915
      %s917 = sshll.u32 %s5, 4
      %s918 = int_to_ptr.hbm [resolvable:$true] %s917
      %920 = dma.vmem_to_hbm [thread:$0]  %s916, 16, %s918, [#allocation9]
    $region33: #{tpu_custom_call.1} parent=1 // pred_fallthru
      _
    // Predicated region
    $region34: #{tpu_custom_call.1} parent=1 // pred_check
      _
    $region35: #{tpu_custom_call.1} parent=1 // pred_check_branch
      %922 = sbr.rel (0) target = $region37
    $region36: #{tpu_custom_call.1} parent=1 // pred_region
      %924 = vsyncadd [#allocation9], 0
      %s926 = sshll.u32 [#allocation10], 4
      %s927 = int_to_ptr.vmem [resolvable:$true] %s926
      %s928 = sshll.u32 %s6, 4
      %s929 = int_to_ptr.hbm [resolvable:$true] %s928
      %931 = dma.vmem_to_hbm [thread:$0]  %s927, 16, %s929, [#allocation9]
    $region37: #{tpu_custom_call.1} parent=1 // pred_fallthru
      _
    // Predicated region
    $region38: #{tpu_custom_call.1} parent=1 // pred_check
      _
    $region39: #{tpu_custom_call.1} parent=1 // pred_check_branch
      %933 = sbr.rel (0) target = $region41
    $region40: #{tpu_custom_call.1} parent=1 // pred_region
      %935 = dma.done [#allocation4], 4096
    $region41: #{tpu_custom_call.1} parent=1 // pred_fallthru
      _
    // Predicated region
    $region42: #{tpu_custom_call.1} parent=1 // pred_check
      _
    $region43: #{tpu_custom_call.1} parent=1 // pred_check_branch
      %937 = sbr.rel (0) target = $region45
    $region44: #{tpu_custom_call.1} parent=1 // pred_region
      %939 = dma.done [#allocation9], 16
    $region45: #{tpu_custom_call.1} parent=1 // pred_fallthru
      _
    // Predicated region
    $region46: #{tpu_custom_call.1} parent=1 // pred_check
      _
    $region47: #{tpu_custom_call.1} parent=1 // pred_check_branch
      %941 = sbr.rel (0) target = $region49
    $region48: #{tpu_custom_call.1} parent=1 // pred_region
      %943 = dma.done [#allocation9], 16
    $region49: #{tpu_custom_call.1} parent=1 // pred_fallthru
      _
    %944 = vsyncpa [#allocation3], 1
    %945 = vsyncpa [#allocation6], 1
    %946 = vsyncpa [#allocation4], 1
    %947 = vsyncpa [#allocation9], 1

</llo_original>
